<compile_context>
chip_gen: v7x
topology: tpu7x:2x2x1
jax: 0.10.0
libtpu: 0.0.40
codegen_flags: <defaults>
</compile_context>

<pallas_src>
import jax
import jax.numpy as jnp
from jax.experimental import pallas as pl
from jax.experimental.pallas import tpu as pltpu

_LANES = 128
_SUBLANES = 8
_MAX_BLOCK_ROWS = 1024         # (1024, 128) f32 block = 512 KiB per array
_PALLAS_MIN_SIZE = 64 * 1024   # below this, plain XLA ops beat pallas_call overhead


def _kernel(a_ref, c_ref, ab_ref, ac_ref, bz_ref):
    a = a_ref[...]
    ab_ref[...] = a                        # a + zeroed(b) == a (b never loaded)
    ac_ref[...] = a + c_ref[...]
    bz_ref[...] = jnp.zeros_like(bz_ref)   # the "in-place zeroed" b


def _round_up(x, m):
    return (x + m - 1) // m * m


def _pallas_forward(a, b_dtype, c):
    """Pallas path: returns (a+0, a+c, zeros) at a's shape, zeros in b_dtype."""
    n = a.size
    orig_shape = a.shape

    # Lane/sublane-dense slab: (rows, 128) with rows a multiple of 8, padded so
    # the grid divides evenly (no partial / masked blocks).
    rows = _round_up(pl.cdiv(n, _LANES), _SUBLANES)
    block_rows = min(_MAX_BLOCK_ROWS, rows)
    rows = _round_up(rows, block_rows)
    padded = rows * _LANES

    def to_slab(x):
        flat = x.reshape(-1)
        flat = jnp.pad(flat, (0, padded - n))
        return flat.reshape(rows, _LANES)

    a2 = to_slab(a)
    c2 = to_slab(c)

    spec = pl.BlockSpec((block_rows, _LANES), lambda i: (i, 0))
    grid = (rows // block_rows,)
    out_shape = (
        jax.ShapeDtypeStruct((rows, _LANES), a.dtype),   # a + b (== a)
        jax.ShapeDtypeStruct((rows, _LANES), a.dtype),   # a + c
        jax.ShapeDtypeStruct((rows, _LANES), b_dtype),   # zeroed b
    )

    ab, ac, bz = pl.pallas_call(
        _kernel,
        grid=grid,
        in_specs=[spec, spec],            # note: b is NOT an input
        out_specs=(spec, spec, spec),
        out_shape=out_shape,
        # ab is value-identical to a -> reuse a's (slab) HBM buffer.
        input_output_aliases={0: 0},
        compiler_params=pltpu.CompilerParams(
            dimension_semantics=("parallel",),
            vmem_limit_bytes=32 * 1024 * 1024,
        ),
    )(a2, c2)

    def from_slab(x):
        return x.reshape(-1)[:n].reshape(orig_shape)

    return from_slab(ab), from_slab(ac), from_slab(bz)


def duplicated_inplace_update(a, b, c, *, force_pallas=False):
    """Functional equivalent of DirectReturnWithDuplicatedInplaceUpdateModule.forward.

    Returns (a + b_zeroed, a + c, b_zeroed, b_zeroed) with b_zeroed = zeros_like(b).
    The same zeroed array is returned twice, mirroring the fact that the XLA
    graph only materializes b once even though it appears twice in the tuple.
    """
    assert a.shape == b.shape == c.shape
    # TODO(synk): true in-place mutation of the caller's `b` buffer has no JAX
    # equivalent (arrays are immutable); the zeroed b is returned functionally.
    if a.size < _PALLAS_MIN_SIZE and not force_pallas:
        # Tiny sizes: pallas_call custom-call + per-step overhead dominates;
        # plain XLA fusion is strictly faster on every TPU generation.
        b_new = jnp.zeros_like(b)
        return (a + b_new, a + c, b_new, b_new)
    ab, ac, b_new = _pallas_forward(a, b.dtype, c)
    return (ab, ac, b_new, b_new)


if __name__ == "__main__":
    keys = jax.random.split(jax.random.PRNGKey(0), 6)

    # Module's example inputs: three float32 vectors of length 2.
    a = jax.random.uniform(keys[0], (2,), dtype=jnp.float32)
    b = jax.random.uniform(keys[1], (2,), dtype=jnp.float32)
    c = jax.random.uniform(keys[2], (2,), dtype=jnp.float32)

    # 1) Default path at N=2 (plain jnp fast path).
    outs_small = duplicated_inplace_update(a, b, c)
    # 2) Force the Pallas kernel on the same tiny example (padded to one (8,128) block).
    outs_pallas_small = duplicated_inplace_update(a, b, c, force_pallas=True)
    # 3) Exercise the Pallas path at a lane/sublane-dense size (N = 2048 -> 16x128 slab).
    N = 2048
    A = jax.random.uniform(keys[3], (N,), dtype=jnp.float32)
    B = jax.random.uniform(keys[4], (N,), dtype=jnp.float32)
    C = jax.random.uniform(keys[5], (N,), dtype=jnp.float32)
    outs_pallas = duplicated_inplace_update(A, B, C, force_pallas=True)

    jax.block_until_ready((outs_small, outs_pallas_small, outs_pallas))

    def check(outs, a_, b_, c_):
        ab, ac, b1, b2 = outs
        assert ab.shape == a_.shape and ac.shape == a_.shape
        assert b1.shape == b_.shape and b2.shape == b_.shape
        assert jnp.allclose(ab, a_), "a + zeroed(b) must equal a"
        assert jnp.allclose(ac, a_ + c_), "a + c mismatch"
        assert jnp.allclose(b1, jnp.zeros_like(b_)), "first returned b must be zeroed"
        assert jnp.allclose(b2, jnp.zeros_like(b_)), "second returned b must be zeroed"

    check(outs_small, a, b, c)
    check(outs_pallas_small, a, b, c)
    check(outs_pallas, A, B, C)

    print("KERNEL_OK")
</pallas_src>

<mosaic_0001>
module attributes {stable_mosaic.version = 11 : i64} {
  func.func @_kernel(%arg0: i32, %arg1: memref<8x128xf32, #tpu.memory_space<vmem>>, %arg2: memref<8x128xf32, #tpu.memory_space<vmem>>, %arg3: memref<8x128xf32, #tpu.memory_space<vmem>>, %arg4: memref<8x128xf32, #tpu.memory_space<vmem>>, %arg5: memref<8x128xf32, #tpu.memory_space<vmem>>) attributes {dimension_semantics = [#tpu.dimension_semantics<parallel>], iteration_bounds = array<i64: 1>, scalar_prefetch = 0 : i64, scratch_operands = 0 : i64, tpu.core_type = #tpu.core_type<tc>, window_params = [{transform_indices = @transform_0, window_bounds = array<i64: 8, 128>}, {transform_indices = @transform_1, window_bounds = array<i64: 8, 128>}, {transform_indices = @transform_2, window_bounds = array<i64: 8, 128>}, {transform_indices = @transform_3, window_bounds = array<i64: 8, 128>}, {transform_indices = @transform_4, window_bounds = array<i64: 8, 128>}]} {
    %c0 = arith.constant 0 : index
    %c0_0 = arith.constant 0 : index
    %0 = vector.load %arg1[%c0, %c0_0] : memref<8x128xf32, #tpu.memory_space<vmem>>, vector<8x128xf32>
    %c0_1 = arith.constant 0 : index
    %c0_2 = arith.constant 0 : index
    %1 = vector.load %arg3[%c0_1, %c0_2] : memref<8x128xf32, #tpu.memory_space<vmem>>, vector<8x128xf32>
    tpu.vector_store %arg3[%c0_1, %c0_2], %0 {strides = array<i32>} : memref<8x128xf32, #tpu.memory_space<vmem>>, vector<8x128xf32>,
    %c0_3 = arith.constant 0 : index
    %c0_4 = arith.constant 0 : index
    %2 = vector.load %arg2[%c0_3, %c0_4] : memref<8x128xf32, #tpu.memory_space<vmem>>, vector<8x128xf32>
    %3 = arith.addf %0, %2 : vector<8x128xf32>
    %c0_5 = arith.constant 0 : index
    %c0_6 = arith.constant 0 : index
    %4 = vector.load %arg4[%c0_5, %c0_6] : memref<8x128xf32, #tpu.memory_space<vmem>>, vector<8x128xf32>
    tpu.vector_store %arg4[%c0_5, %c0_6], %3 {strides = array<i32>} : memref<8x128xf32, #tpu.memory_space<vmem>>, vector<8x128xf32>,
    %cst = arith.constant 0.000000e+00 : f32
    %5 = vector.broadcast %cst : f32 to vector<8x128xf32>
    %c0_7 = arith.constant 0 : index
    %c0_8 = arith.constant 0 : index
    %6 = vector.load %arg5[%c0_7, %c0_8] : memref<8x128xf32, #tpu.memory_space<vmem>>, vector<8x128xf32>
    tpu.vector_store %arg5[%c0_7, %c0_8], %5 {strides = array<i32>} : memref<8x128xf32, #tpu.memory_space<vmem>>, vector<8x128xf32>,
    return
  }
  func.func @transform_0(%arg0: i32) -> (i32, i32) {
    %c0_i32 = arith.constant 0 : i32
    %c0_i32_0 = arith.constant 0 : i32
    return %arg0, %c0_i32 : i32, i32
  }
  func.func @transform_1(%arg0: i32) -> (i32, i32) {
    %c0_i32 = arith.constant 0 : i32
    %c0_i32_0 = arith.constant 0 : i32
    return %arg0, %c0_i32 : i32, i32
  }
  func.func @transform_2(%arg0: i32) -> (i32, i32) {
    %c0_i32 = arith.constant 0 : i32
    %c0_i32_0 = arith.constant 0 : i32
    return %arg0, %c0_i32 : i32, i32
  }
  func.func @transform_3(%arg0: i32) -> (i32, i32) {
    %c0_i32 = arith.constant 0 : i32
    %c0_i32_0 = arith.constant 0 : i32
    return %arg0, %c0_i32 : i32, i32
  }
  func.func @transform_4(%arg0: i32) -> (i32, i32) {
    %c0_i32 = arith.constant 0 : i32
    %c0_i32_0 = arith.constant 0 : i32
    return %arg0, %c0_i32 : i32, i32
  }
}

</mosaic_0001>

<llo_original>
// kernel: tpu_custom_call.1
$region0: #{tpu_custom_call.1}
  #allocation0 [shape = 'u32[]', space=smem, size = 0x4, offset = 0x4, fixed_abs, tag = 'smem constant byte address 0x4 - core index']
  #allocation1 [shape = 'u32[144,128]{1,0:T(1,128)}', space=vmem, size = 0x12000, scoped, tag = 'internal scratch']
  %s0 = inlined_call_operand.hbm [shape: f32[8,128], index: 0, kind: input, shape index: {}, may-alias: {0,2}]
  %s1 = inlined_call_operand.vmem [shape: f32[8,128], index: 1, kind: input, shape index: {}]
  %s2 = inlined_call_operand.hbm [shape: f32[8,128], index: 2, kind: output, shape index: {0}, may-alias: {0,2}]
  %s3 = inlined_call_operand.hbm [shape: f32[8,128], index: 3, kind: output, shape index: {1}]
  %s4 = inlined_call_operand.hbm [shape: f32[8,128], index: 4, kind: output, shape index: {2}]
  %5 = xla_tuple %s2, %s3, %s4
  %s6 = sld [smem:[#allocation0]]
  $region38: #{tpu_custom_call.1} parent=0
    _
  %s8 = ssub.s32 1, %s6
  %s9 = scalar_select 0, %s8, %s6
  $region1: #{tpu_custom_call.1} parent=0
    #allocation2 [shape = 'u8[4096]{0}', space=vmem, size = 0x1000, scoped, tag = 'input window, operand 0, single buffered']
    #allocation3 [shape = 's32[1]{0}', space=sflag, size = 0x4, scoped, tag = 'scoped memory for tpu_custom_call.1']
    #allocation4 [shape = 's32[1]{0}', space=sflag, size = 0x4, scoped, tag = 'scoped memory for tpu_custom_call.1']
    #allocation5 [shape = 'u8[4096]{0}', space=vmem, size = 0x1000, scoped, tag = 'output window, operand 0, single buffered']
    #allocation6 [shape = 'u8[4096]{0}', space=vmem, size = 0x1000, scoped, tag = 'output window, operand 1, single buffered']
    #allocation7 [shape = 's32[1]{0}', space=sflag, size = 0x4, scoped, tag = 'scoped memory for tpu_custom_call.1']
    #allocation8 [shape = 'u8[4096]{0}', space=vmem, size = 0x1000, scoped, tag = 'output window, operand 2, single buffered']
    %10 = vsyncpa [#allocation3], 0
    %11 = vsyncpa [#allocation4], 0
    %12 = vsyncpa [#allocation7], 0
    // Predicated region
    $region2: #{tpu_custom_call.1} parent=1 // pred_check
      _
    $region3: #{tpu_custom_call.1} parent=1 // pred_check_branch
      %14 = sbr.rel (0) target = $region5
    $region4: #{tpu_custom_call.1} parent=1 // pred_region
      %s16 = ssub.s32 128, 128
      %17 = vsyncadd [#allocation3], %s16
      %s19 = sshll.u32 [#allocation2], 4
      %s20 = int_to_ptr.vmem [resolvable:$true] %s19
      %22 = dma.hbm_to_vmem [thread:$0]  %s0, 128, %s20, [#allocation3]
    $region5: #{tpu_custom_call.1} parent=1 // pred_fallthru
      _
    // Predicated region
    $region6: #{tpu_custom_call.1} parent=1 // pred_check
      _
    $region7: #{tpu_custom_call.1} parent=1 // pred_check_branch
      %24 = sbr.rel (0) target = $region9
    $region8: #{tpu_custom_call.1} parent=1 // pred_region
      _
    $region9: #{tpu_custom_call.1} parent=1 // pred_fallthru
      _
    // Predicated region
    $region10: #{tpu_custom_call.1} parent=1 // pred_check
      _
    $region11: #{tpu_custom_call.1} parent=1 // pred_check_branch
      %26 = sbr.rel (0) target = $region13
    $region12: #{tpu_custom_call.1} parent=1 // pred_region
      %27 = dma.done [#allocation3], 128
    $region13: #{tpu_custom_call.1} parent=1 // pred_fallthru
      _
    %v28 = vld [vmem:[#allocation2] sm:$0xff]
    %29 = vst [vmem:[#allocation5] sm:$0xff] %v28
    %v30 = vld [vmem:[%s1] sm:$0xff]
    %v31 = vadd.f32 %v28, %v30
    %32 = vst [vmem:[#allocation6] sm:$0xff] %v31
    %33 = vst [vmem:[#allocation8] sm:$0xff] 0.0
    // Predicated region
    $region14: #{tpu_custom_call.1} parent=1 // pred_check
      _
    $region15: #{tpu_custom_call.1} parent=1 // pred_check_branch
      %35 = sbr.rel (0) target = $region17
    $region16: #{tpu_custom_call.1} parent=1 // pred_region
      %s37 = ssub.s32 128, 128
      %38 = vsyncadd [#allocation4], %s37
      %s40 = sshll.u32 [#allocation5], 4
      %s41 = int_to_ptr.vmem [resolvable:$true] %s40
      %43 = dma.vmem_to_hbm [thread:$0]  %s41, 128, %s2, [#allocation4]
    $region17: #{tpu_custom_call.1} parent=1 // pred_fallthru
      _
    // Predicated region
    $region18: #{tpu_custom_call.1} parent=1 // pred_check
      _
    $region19: #{tpu_custom_call.1} parent=1 // pred_check_branch
      %45 = sbr.rel (0) target = $region21
    $region20: #{tpu_custom_call.1} parent=1 // pred_region
      %s47 = ssub.s32 128, 128
      %48 = vsyncadd [#allocation7], %s47
      %s50 = sshll.u32 [#allocation6], 4
      %s51 = int_to_ptr.vmem [resolvable:$true] %s50
      %53 = dma.vmem_to_hbm [thread:$0]  %s51, 128, %s3, [#allocation7]
    $region21: #{tpu_custom_call.1} parent=1 // pred_fallthru
      _
    // Predicated region
    $region22: #{tpu_custom_call.1} parent=1 // pred_check
      _
    $region23: #{tpu_custom_call.1} parent=1 // pred_check_branch
      %55 = sbr.rel (0) target = $region25
    $region24: #{tpu_custom_call.1} parent=1 // pred_region
      %s57 = ssub.s32 128, 128
      %58 = vsyncadd [#allocation7], %s57
      %s60 = sshll.u32 [#allocation8], 4
      %s61 = int_to_ptr.vmem [resolvable:$true] %s60
      %63 = dma.vmem_to_hbm [thread:$0]  %s61, 128, %s4, [#allocation7]
    $region25: #{tpu_custom_call.1} parent=1 // pred_fallthru
      _
    // Predicated region
    $region26: #{tpu_custom_call.1} parent=1 // pred_check
      _
    $region27: #{tpu_custom_call.1} parent=1 // pred_check_branch
      %65 = sbr.rel (0) target = $region29
    $region28: #{tpu_custom_call.1} parent=1 // pred_region
      %66 = dma.done [#allocation4], 128
    $region29: #{tpu_custom_call.1} parent=1 // pred_fallthru
      _
    // Predicated region
    $region30: #{tpu_custom_call.1} parent=1 // pred_check
      _
    $region31: #{tpu_custom_call.1} parent=1 // pred_check_branch
      %68 = sbr.rel (0) target = $region33
    $region32: #{tpu_custom_call.1} parent=1 // pred_region
      %69 = dma.done [#allocation7], 128
    $region33: #{tpu_custom_call.1} parent=1 // pred_fallthru
      _
    // Predicated region
    $region34: #{tpu_custom_call.1} parent=1 // pred_check
      _
    $region35: #{tpu_custom_call.1} parent=1 // pred_check_branch
      %71 = sbr.rel (0) target = $region37
    $region36: #{tpu_custom_call.1} parent=1 // pred_region
      %72 = dma.done [#allocation7], 128
    $region37: #{tpu_custom_call.1} parent=1 // pred_fallthru
      _
    %73 = vsyncpa [#allocation3], 1
    %74 = vsyncpa [#allocation4], 1
    %75 = vsyncpa [#allocation7], 1

</llo_original>
